<compile_context>
chip_gen: v7x
topology: tpu7x:2x2x1
jax: 0.10.0
libtpu: 0.0.40
codegen_flags: <defaults>
</compile_context>

<pallas_src>
import functools

import jax
import jax.numpy as jnp
from jax.experimental import pallas as pl
from jax.experimental.pallas import tpu as pltpu

_LANE = 128
_MAX_BLOCK_ROWS = 1024   # 1024 x 128 f32 = 512 KiB per input block
_NUM_SHARDS = 2          # leading "parallel" axis (2 TCs on v7x; harmless on 1-TC)


def _fused_sums_kernel(bt_ref, bp_ref, db_ref, o_data_ref, o_div_ref, *,
                       tiles_per_shard, blk_b, blk_d, b_rows, d_rows):
    """Accumulate sum(|bt-bp|) and sum(|db|) into per-shard (8,128) partials."""
    c = pl.program_id(0)          # shard (parallel)
    i = pl.program_id(1)          # tile within shard (arbitrary / reduction)
    t = c * tiles_per_shard + i   # logical global tile index (may be out of range)

    @pl.when(i == 0)
    def _():
        o_data_ref[...] = jnp.zeros_like(o_data_ref)
        o_div_ref[...] = jnp.zeros_like(o_div_ref)

    # ---- data term: sum(|B_true - B_pred|) over valid rows of this tile ----
    row0 = t * blk_b
    row_ids = jax.lax.broadcasted_iota(jnp.int32, (blk_b, 1), 0) + row0
    diff = jnp.abs(bt_ref[...].astype(jnp.float32) -
                   bp_ref[...].astype(jnp.float32))
    diff = jnp.where(row_ids < b_rows, diff, 0.0)
    # Pure VPU add-tree across (8,128) vreg slabs; no per-step cross-lane reduce.
    o_data_ref[...] += diff.reshape(blk_b // 8, 8, _LANE).sum(axis=0)

    # ---- physics term: sum(|divB|) over valid rows of this tile ----
    row0d = t * blk_d
    row_ids_d = jax.lax.broadcasted_iota(jnp.int32, (blk_d, 1), 0) + row0d
    av = jnp.where(row_ids_d < d_rows,
                   jnp.abs(db_ref[...].astype(jnp.float32)), 0.0)
    o_div_ref[...] += av.reshape(blk_d // 8, 8, _LANE).sum(axis=0)


def _to_rows(x: jax.Array) -> jax.Array:
    """Flatten to a lane-dense (rows, 128) slab. Only pads (copies) when the
    element count is not a multiple of 128; zero padding is exact for |.|."""
    flat = x.reshape(-1)
    n = flat.shape[0]
    rem = n % _LANE
    if rem:
        flat = jnp.pad(flat, (0, _LANE - rem))
    return flat.reshape(-1, _LANE)


def _round_up8(r: int) -> int:
    return ((r + 7) // 8) * 8


def _divergence_sums(B_true: jax.Array, B_pred: jax.Array, divB: jax.Array):
    bt = _to_rows(B_true)
    bp = _to_rows(B_pred)
    db = _to_rows(divB)
    b_rows = bt.shape[0]
    d_rows = db.shape[0]

    blk_b = min(_MAX_BLOCK_ROWS, _round_up8(b_rows))
    blk_d = min(_MAX_BLOCK_ROWS, _round_up8(d_rows))
    nb_tiles = pl.cdiv(b_rows, blk_b)
    nd_tiles = pl.cdiv(d_rows, blk_d)
    total_tiles = max(nb_tiles, nd_tiles)
    tiles_per_shard = pl.cdiv(total_tiles, _NUM_SHARDS)

    # Clamp block indices for out-of-range tiles; the block index then stops
    # changing so the DMA is skipped, and the in-kernel row mask zeroes the
    # (stale) contribution.
    def b_map(c, i):
        return (jnp.minimum(c * tiles_per_shard + i, nb_tiles - 1), 0)

    def d_map(c, i):
        return (jnp.minimum(c * tiles_per_shard + i, nd_tiles - 1), 0)

    def out_map(c, i):
        return (c, 0)   # constant across i -> VMEM-resident accumulator per shard

    kernel = functools.partial(
        _fused_sums_kernel,
        tiles_per_shard=tiles_per_shard,
        blk_b=blk_b, blk_d=blk_d,
        b_rows=b_rows, d_rows=d_rows,
    )

    out_data, out_div = pl.pallas_call(
        kernel,
        out_shape=(
            jax.ShapeDtypeStruct((_NUM_SHARDS * 8, _LANE), jnp.float32),
            jax.ShapeDtypeStruct((_NUM_SHARDS * 8, _LANE), jnp.float32),
        ),
        grid_spec=pltpu.PrefetchScalarGridSpec(
            num_scalar_prefetch=0,
            grid=(_NUM_SHARDS, tiles_per_shard),
            in_specs=[
                pl.BlockSpec((blk_b, _LANE), b_map),
                pl.BlockSpec((blk_b, _LANE), b_map),
                pl.BlockSpec((blk_d, _LANE), d_map),
            ],
            out_specs=(
                pl.BlockSpec((8, _LANE), out_map),
                pl.BlockSpec((8, _LANE), out_map),
            ),
        ),
        compiler_params=pltpu.CompilerParams(
            dimension_semantics=("parallel", "arbitrary"),
        ),
    )(bt, bp, db)

    return jnp.sum(out_data), jnp.sum(out_div)


@jax.jit
def divergence_loss(B_true: jax.Array, B_pred: jax.Array, divB: jax.Array,
                    lambda_: jax.Array | float = 1.0) -> jax.Array:
    """Equivalent to DivergenceLoss(lambda_, F.l1_loss)(B_true, B_pred, divB)."""
    data_sum, div_sum = _divergence_sums(B_true, B_pred, divB)
    data_loss = data_sum / jnp.float32(B_true.size)
    physics_loss = div_sum / jnp.float32(divB.size)
    return data_loss + lambda_ * physics_loss


if __name__ == "__main__":
    key = jax.random.PRNGKey(0)
    k1, k2, k3 = jax.random.split(key, 3)

    # Small NCHW-style shapes: B field has 3 components, divB has 1 channel.
    B_true = jax.random.normal(k1, (2, 3, 16, 16), dtype=jnp.float32)
    B_pred = jax.random.normal(k2, (2, 3, 16, 16), dtype=jnp.float32)
    divB = jax.random.normal(k3, (2, 1, 16, 16), dtype=jnp.float32)

    loss = divergence_loss(B_true, B_pred, divB, 1.0)
    loss = jax.block_until_ready(loss)

    # Reference check in plain JAX (same math as the PyTorch module).
    ref = jnp.mean(jnp.abs(B_true - B_pred)) + 1.0 * jnp.mean(jnp.abs(divB))
    assert jnp.allclose(loss, ref, rtol=1e-5, atol=1e-6), (loss, ref)

    print("KERNEL_OK")
</pallas_src>

<mosaic_0001>
module attributes {stable_mosaic.version = 11 : i64} {
  func.func @_fused_sums_kernel(%arg0: i32, %arg1: i32, %arg2: memref<16x128xf32, #tpu.memory_space<vmem>>, %arg3: memref<16x128xf32, #tpu.memory_space<vmem>>, %arg4: memref<8x128xf32, #tpu.memory_space<vmem>>, %arg5: memref<8x128xf32, #tpu.memory_space<vmem>>, %arg6: memref<8x128xf32, #tpu.memory_space<vmem>>) attributes {dimension_semantics = [#tpu.dimension_semantics<parallel>, #tpu.dimension_semantics<arbitrary>], iteration_bounds = array<i64: 2, 1>, scalar_prefetch = 0 : i64, scratch_operands = 0 : i64, tpu.core_type = #tpu.core_type<tc>, window_params = [{transform_indices = @transform_0, window_bounds = array<i64: 16, 128>}, {transform_indices = @transform_1, window_bounds = array<i64: 16, 128>}, {transform_indices = @transform_2, window_bounds = array<i64: 8, 128>}, {transform_indices = @transform_3, window_bounds = array<i64: 8, 128>}, {transform_indices = @transform_4, window_bounds = array<i64: 8, 128>}]} {
    %c1_i32 = arith.constant 1 : i32
    %0 = arith.muli %arg0, %c1_i32 : i32
    %1 = arith.addi %0, %arg1 : i32
    %c0_i32 = arith.constant 0 : i32
    %2 = arith.cmpi eq, %arg1, %c0_i32 : i32
    %3 = arith.extui %2 : i1 to i32
    %c0_i32_0 = arith.constant 0 : i32
    %4 = arith.cmpi ne, %3, %c0_i32_0 : i32
    scf.if %4 {
      %cst_17 = arith.constant 0.000000e+00 : f32
      %41 = vector.broadcast %cst_17 : f32 to vector<8x128xf32>
      %c0_18 = arith.constant 0 : index
      %c0_19 = arith.constant 0 : index
      %42 = vector.load %arg5[%c0_18, %c0_19] : memref<8x128xf32, #tpu.memory_space<vmem>>, vector<8x128xf32>
      tpu.vector_store %arg5[%c0_18, %c0_19], %41 {strides = array<i32>} : memref<8x128xf32, #tpu.memory_space<vmem>>, vector<8x128xf32>,
      %cst_20 = arith.constant 0.000000e+00 : f32
      %43 = vector.broadcast %cst_20 : f32 to vector<8x128xf32>
      %c0_21 = arith.constant 0 : index
      %c0_22 = arith.constant 0 : index
      %44 = vector.load %arg6[%c0_21, %c0_22] : memref<8x128xf32, #tpu.memory_space<vmem>>, vector<8x128xf32>
      tpu.vector_store %arg6[%c0_21, %c0_22], %43 {strides = array<i32>} : memref<8x128xf32, #tpu.memory_space<vmem>>, vector<8x128xf32>,
    } else {
    }
    %c16_i32 = arith.constant 16 : i32
    %5 = arith.muli %1, %c16_i32 : i32
    %6 = tpu.iota {dimensions = array<i32: 0>} : vector<16x1xi32>
    %7 = vector.broadcast %5 : i32 to vector<16x1xi32>
    %8 = arith.addi %6, %7 : vector<16x1xi32>
    %c0 = arith.constant 0 : index
    %c0_1 = arith.constant 0 : index
    %9 = vector.load %arg2[%c0, %c0_1] : memref<16x128xf32, #tpu.memory_space<vmem>>, vector<16x128xf32>
    %c0_2 = arith.constant 0 : index
    %c0_3 = arith.constant 0 : index
    %10 = vector.load %arg3[%c0_2, %c0_3] : memref<16x128xf32, #tpu.memory_space<vmem>>, vector<16x128xf32>
    %11 = arith.subf %9, %10 : vector<16x128xf32>
    %12 = math.absf %11 : vector<16x128xf32>
    %c12_i32 = arith.constant 12 : i32
    %13 = vector.broadcast %c12_i32 : i32 to vector<16x1xi32>
    %14 = arith.cmpi slt, %8, %13 : vector<16x1xi32>
    %cst = arith.constant 0.000000e+00 : f32
    %15 = vector.shape_cast %14 : vector<16x1xi1> to vector<16x1xi1>
    %16 = vector.broadcast %15 : vector<16x1xi1> to vector<16x128xi1>
    %17 = vector.broadcast %cst : f32 to vector<16x128xf32>
    %18 = arith.select %16, %12, %17 : vector<16x128xi1>, vector<16x128xf32>
    %c0_4 = arith.constant 0 : index
    %c0_5 = arith.constant 0 : index
    %19 = vector.load %arg5[%c0_4, %c0_5] : memref<8x128xf32, #tpu.memory_space<vmem>>, vector<8x128xf32>
    %20 = vector.shape_cast %18 : vector<16x128xf32> to vector<2x8x128xf32>
    %cst_6 = arith.constant dense<0.000000e+00> : vector<8x128xf32>
    %21 = vector.multi_reduction <add>, %20, %cst_6 [0] : vector<2x8x128xf32> to vector<8x128xf32>
    %22 = arith.addf %19, %21 : vector<8x128xf32>
    %c0_7 = arith.constant 0 : index
    %c0_8 = arith.constant 0 : index
    %23 = vector.load %arg5[%c0_7, %c0_8] : memref<8x128xf32, #tpu.memory_space<vmem>>, vector<8x128xf32>
    tpu.vector_store %arg5[%c0_7, %c0_8], %22 {strides = array<i32>} : memref<8x128xf32, #tpu.memory_space<vmem>>, vector<8x128xf32>,
    %c8_i32 = arith.constant 8 : i32
    %24 = arith.muli %1, %c8_i32 : i32
    %25 = tpu.iota {dimensions = array<i32: 0>} : vector<8x1xi32>
    %26 = vector.broadcast %24 : i32 to vector<8x1xi32>
    %27 = arith.addi %25, %26 : vector<8x1xi32>
    %c4_i32 = arith.constant 4 : i32
    %28 = vector.broadcast %c4_i32 : i32 to vector<8x1xi32>
    %29 = arith.cmpi slt, %27, %28 : vector<8x1xi32>
    %c0_9 = arith.constant 0 : index
    %c0_10 = arith.constant 0 : index
    %30 = vector.load %arg4[%c0_9, %c0_10] : memref<8x128xf32, #tpu.memory_space<vmem>>, vector<8x128xf32>
    %31 = math.absf %30 : vector<8x128xf32>
    %cst_11 = arith.constant 0.000000e+00 : f32
    %32 = vector.shape_cast %29 : vector<8x1xi1> to vector<8x1xi1>
    %33 = vector.broadcast %32 : vector<8x1xi1> to vector<8x128xi1>
    %34 = vector.broadcast %cst_11 : f32 to vector<8x128xf32>
    %35 = arith.select %33, %31, %34 : vector<8x128xi1>, vector<8x128xf32>
    %c0_12 = arith.constant 0 : index
    %c0_13 = arith.constant 0 : index
    %36 = vector.load %arg6[%c0_12, %c0_13] : memref<8x128xf32, #tpu.memory_space<vmem>>, vector<8x128xf32>
    %37 = vector.shape_cast %35 : vector<8x128xf32> to vector<1x8x128xf32>
    %cst_14 = arith.constant dense<0.000000e+00> : vector<8x128xf32>
    %38 = vector.multi_reduction <add>, %37, %cst_14 [0] : vector<1x8x128xf32> to vector<8x128xf32>
    %39 = arith.addf %36, %38 : vector<8x128xf32>
    %c0_15 = arith.constant 0 : index
    %c0_16 = arith.constant 0 : index
    %40 = vector.load %arg6[%c0_15, %c0_16] : memref<8x128xf32, #tpu.memory_space<vmem>>, vector<8x128xf32>
    tpu.vector_store %arg6[%c0_15, %c0_16], %39 {strides = array<i32>} : memref<8x128xf32, #tpu.memory_space<vmem>>, vector<8x128xf32>,
    return
  }
  func.func @transform_0(%arg0: i32, %arg1: i32) -> (i32, i32) {
    %c1_i32 = arith.constant 1 : i32
    %0 = arith.muli %arg0, %c1_i32 : i32
    %1 = arith.addi %0, %arg1 : i32
    %c0_i32 = arith.constant 0 : i32
    %2 = arith.minsi %1, %c0_i32 : i32
    %c0_i32_0 = arith.constant 0 : i32
    %c0_i32_1 = arith.constant 0 : i32
    return %2, %c0_i32_0 : i32, i32
  }
  func.func @transform_1(%arg0: i32, %arg1: i32) -> (i32, i32) {
    %c1_i32 = arith.constant 1 : i32
    %0 = arith.muli %arg0, %c1_i32 : i32
    %1 = arith.addi %0, %arg1 : i32
    %c0_i32 = arith.constant 0 : i32
    %2 = arith.minsi %1, %c0_i32 : i32
    %c0_i32_0 = arith.constant 0 : i32
    %c0_i32_1 = arith.constant 0 : i32
    return %2, %c0_i32_0 : i32, i32
  }
  func.func @transform_2(%arg0: i32, %arg1: i32) -> (i32, i32) {
    %c1_i32 = arith.constant 1 : i32
    %0 = arith.muli %arg0, %c1_i32 : i32
    %1 = arith.addi %0, %arg1 : i32
    %c0_i32 = arith.constant 0 : i32
    %2 = arith.minsi %1, %c0_i32 : i32
    %c0_i32_0 = arith.constant 0 : i32
    %c0_i32_1 = arith.constant 0 : i32
    return %2, %c0_i32_0 : i32, i32
  }
  func.func @transform_3(%arg0: i32, %arg1: i32) -> (i32, i32) {
    %c0_i32 = arith.constant 0 : i32
    %c0_i32_0 = arith.constant 0 : i32
    return %arg0, %c0_i32 : i32, i32
  }
  func.func @transform_4(%arg0: i32, %arg1: i32) -> (i32, i32) {
    %c0_i32 = arith.constant 0 : i32
    %c0_i32_0 = arith.constant 0 : i32
    return %arg0, %c0_i32 : i32, i32
  }
}

</mosaic_0001>

<llo_original>
// kernel: divergence_loss.1
$region0: #{divergence_loss.1}
  #allocation0 [shape = 'u32[]', space=smem, size = 0x4, offset = 0x4, fixed_abs, tag = 'smem constant byte address 0x4 - core index']
  #allocation1 [shape = 'u32[144,128]{1,0:T(1,128)}', space=vmem, size = 0x12000, scoped, tag = 'internal scratch']
  %s0 = inlined_call_operand.vmem [shape: f32[12,128], index: 0, kind: input, shape index: {}]
  %s1 = inlined_call_operand.vmem [shape: f32[12,128], index: 1, kind: input, shape index: {}]
  %s2 = inlined_call_operand.vmem [shape: f32[4,128], index: 2, kind: input, shape index: {}]
  %s3 = inlined_call_operand.vmem [shape: f32[16,128], index: 3, kind: output, shape index: {0}]
  %s4 = inlined_call_operand.vmem [shape: f32[16,128], index: 4, kind: output, shape index: {1}]
  %5 = xla_tuple %s3, %s4
  %s6 = sld [smem:[#allocation0]]
  $region57: #{divergence_loss.1} parent=0
    _
  %s8 = ssub.s32 1, %s6
  %s9 = scalar_select 0, %s8, %s6
  loop: start=0, step=1, limit=4
  $region2: #{divergence_loss.1} parent=0 // loop_pre_header
    _
  $region3: #{divergence_loss.1} parent=0 // loop_header
    %s11 = sphi 0, %s15
    %p12 = scmp.ge.s32.totalorder %s11, 4
    %s18 = sphi 0, %s30
    %s19 = sphi 0, %s26
    %s20 = sphi 0, %s18
    %s21 = sphi 0, %s19
    %s22 = sphi 0, %s20
    %s23 = sphi 0, %s21
    %s39 = sphi 0, %s41
    %s42 = sphi 0, %s39
    %s43 = sphi 0, %s42
    %s59 = sphi 0, %s43
    %s71 = sphi 0, %s73
    %s74 = sphi 0, %s71
    %s75 = sphi 0, %s74
    %s91 = sphi 0, %s75
    %s103 = sphi 0, %s105
    %s106 = sphi 0, %s103
    %s107 = sphi 0, %s106
    %s123 = sphi 0, %s107
    %s129 = sphi 0, %s131
    %s132 = sphi 0, %s129
    %s133 = sphi 0, %s132
    %s149 = sphi 0, %s133
    %s155 = sphi 0, %s157
    %s158 = sphi 0, %s155
    %s159 = sphi 0, %s158
    %s175 = sphi 0, %s159
  $region4: #{divergence_loss.1} parent=0 // loop_header_branch
    %14 = sbr.rel (%p12) target = $region8
  $region5: #{divergence_loss.1} parent=0 // loop_body
    %s16 = ssub.s32 %s11, 1
    %s17 = ssub.s32 %s11, 2
    %s24 = sadd.s32 1, %s19
    %p25 = scmp.ge.s32.totalorder %s24, 1
    %s26 = scalar_select %p25, 0, %s24
    %s27 = sadd.s32 1, %s18
    %s28 = scalar_select %p25, %s27, %s18
    %p29 = scmp.ge.s32.totalorder %s28, 2
    %s30 = scalar_select %p29, 0, %s28
    %s31 = sadd.s32 %s18, %s19
    %p32 = scmp.lt.s32.totalorder %s31, 0
    %s33 = scalar_select %p32, %s31, 0
    %s34 = sadd.s32 %s30, %s26
    %p35 = scmp.lt.s32.totalorder %s34, 0
    %s36 = scalar_select %p35, %s34, 0
    %s37 = ssub.s32 %s33, %s36
    %p38 = scmp.eq.s32.totalorder %s37, 0
    %s40 = sadd.s32 %s39, 1
    %s41 = scalar_select %p38, %s39, %s40
    %p44 = pneg %p38
    %p45 = scmp.eq.s32.totalorder %s11, 1
    %p46 = por %p44, %p45
    %p47 = scmp.ne.s32.totalorder %s39, %s42
    %p48 = scmp.eq.s32.totalorder %s11, 0
    %p49 = por %p47, %p48
    %p50 = scmp.ne.s32.totalorder %s39, %s42
    %p51 = scmp.eq.s32.totalorder %s16, 1
    %p52 = por %p50, %p51
    %p53 = scmp.ne.s32.totalorder %s42, %s43
    %p54 = scmp.eq.s32.totalorder %s16, 0
    %p55 = por %p53, %p54
    %p56 = scmp.ne.s32.totalorder %s42, %s43
    %p57 = scmp.eq.s32.totalorder %s17, 1
    %p58 = por %p56, %p57
    %p60 = scmp.ne.s32.totalorder %s43, %s59
    %p61 = scmp.eq.s32.totalorder %s17, 0
    %p62 = por %p60, %p61
    %s63 = sadd.s32 %s18, %s19
    %p64 = scmp.lt.s32.totalorder %s63, 0
    %s65 = scalar_select %p64, %s63, 0
    %s66 = sadd.s32 %s30, %s26
    %p67 = scmp.lt.s32.totalorder %s66, 0
    %s68 = scalar_select %p67, %s66, 0
    %s69 = ssub.s32 %s65, %s68
    %p70 = scmp.eq.s32.totalorder %s69, 0
    %s72 = sadd.s32 %s71, 1
    %s73 = scalar_select %p70, %s71, %s72
    %p76 = pneg %p70
    %p77 = scmp.eq.s32.totalorder %s11, 1
    %p78 = por %p76, %p77
    %p79 = scmp.ne.s32.totalorder %s71, %s74
    %p80 = scmp.eq.s32.totalorder %s11, 0
    %p81 = por %p79, %p80
    %p82 = scmp.ne.s32.totalorder %s71, %s74
    %p83 = scmp.eq.s32.totalorder %s16, 1
    %p84 = por %p82, %p83
    %p85 = scmp.ne.s32.totalorder %s74, %s75
    %p86 = scmp.eq.s32.totalorder %s16, 0
    %p87 = por %p85, %p86
    %p88 = scmp.ne.s32.totalorder %s74, %s75
    %p89 = scmp.eq.s32.totalorder %s17, 1
    %p90 = por %p88, %p89
    %p92 = scmp.ne.s32.totalorder %s75, %s91
    %p93 = scmp.eq.s32.totalorder %s17, 0
    %p94 = por %p92, %p93
    %s95 = sadd.s32 %s18, %s19
    %p96 = scmp.lt.s32.totalorder %s95, 0
    %s97 = scalar_select %p96, %s95, 0
    %s98 = sadd.s32 %s30, %s26
    %p99 = scmp.lt.s32.totalorder %s98, 0
    %s100 = scalar_select %p99, %s98, 0
    %s101 = ssub.s32 %s97, %s100
    %p102 = scmp.eq.s32.totalorder %s101, 0
    %s104 = sadd.s32 %s103, 1
    %s105 = scalar_select %p102, %s103, %s104
    %p108 = pneg %p102
    %p109 = scmp.eq.s32.totalorder %s11, 1
    %p110 = por %p108, %p109
    %p111 = scmp.ne.s32.totalorder %s103, %s106
    %p112 = scmp.eq.s32.totalorder %s11, 0
    %p113 = por %p111, %p112
    %p114 = scmp.ne.s32.totalorder %s103, %s106
    %p115 = scmp.eq.s32.totalorder %s16, 1
    %p116 = por %p114, %p115
    %p117 = scmp.ne.s32.totalorder %s106, %s107
    %p118 = scmp.eq.s32.totalorder %s16, 0
    %p119 = por %p117, %p118
    %p120 = scmp.ne.s32.totalorder %s106, %s107
    %p121 = scmp.eq.s32.totalorder %s17, 1
    %p122 = por %p120, %p121
    %p124 = scmp.ne.s32.totalorder %s107, %s123
    %p125 = scmp.eq.s32.totalorder %s17, 0
    %p126 = por %p124, %p125
    %s127 = ssub.s32 %s18, %s30
    %p128 = scmp.eq.s32.totalorder %s127, 0
    %s130 = sadd.s32 %s129, 1
    %s131 = scalar_select %p128, %s129, %s130
    %p134 = pneg %p128
    %p135 = scmp.eq.s32.totalorder %s11, 1
    %p136 = por %p134, %p135
    %p137 = scmp.ne.s32.totalorder %s129, %s132
    %p138 = scmp.eq.s32.totalorder %s11, 0
    %p139 = por %p137, %p138
    %p140 = scmp.ne.s32.totalorder %s129, %s132
    %p141 = scmp.eq.s32.totalorder %s16, 1
    %p142 = por %p140, %p141
    %p143 = scmp.ne.s32.totalorder %s132, %s133
    %p144 = scmp.eq.s32.totalorder %s16, 0
    %p145 = por %p143, %p144
    %p146 = scmp.ne.s32.totalorder %s132, %s133
    %p147 = scmp.eq.s32.totalorder %s17, 1
    %p148 = por %p146, %p147
    %p150 = scmp.ne.s32.totalorder %s133, %s149
    %p151 = scmp.eq.s32.totalorder %s17, 0
    %p152 = por %p150, %p151
    %s153 = ssub.s32 %s18, %s30
    %p154 = scmp.eq.s32.totalorder %s153, 0
    %s156 = sadd.s32 %s155, 1
    %s157 = scalar_select %p154, %s155, %s156
    %p160 = pneg %p154
    %p161 = scmp.eq.s32.totalorder %s11, 1
    %p162 = por %p160, %p161
    %p163 = scmp.ne.s32.totalorder %s155, %s158
    %p164 = scmp.eq.s32.totalorder %s11, 0
    %p165 = por %p163, %p164
    %p166 = scmp.ne.s32.totalorder %s155, %s158
    %p167 = scmp.eq.s32.totalorder %s16, 1
    %p168 = por %p166, %p167
    %p169 = scmp.ne.s32.totalorder %s158, %s159
    %p170 = scmp.eq.s32.totalorder %s16, 0
    %p171 = por %p169, %p170
    %p172 = scmp.ne.s32.totalorder %s158, %s159
    %p173 = scmp.eq.s32.totalorder %s17, 1
    %p174 = por %p172, %p173
    %p176 = scmp.ne.s32.totalorder %s159, %s175
    %p177 = scmp.eq.s32.totalorder %s17, 0
    %p178 = por %p176, %p177
    %p179 = scmp.le.s32.totalorder 1, %s11
    %p180 = scmp.lt.s32.totalorder %s11, 3
    %p181 = pnand %p179, %p180
    %p182 = pneg %p181
    // Predicated region
    $region9: #{divergence_loss.1} parent=5 // pred_check
      _
    $region10: #{divergence_loss.1} parent=5 // pred_check_branch
      %184 = sbr.rel (%p181) target = $region12
    $region11: #{divergence_loss.1} parent=5 // pred_region
      %s185 = ssub.s32 %s11, 1
    $region12: #{divergence_loss.1} parent=5 // pred_fallthru
      _
    %p186 = scmp.lt.s32.totalorder %s11, 2
    // Predicated region
    $region13: #{divergence_loss.1} parent=5 // pred_check
      %p187 = pneg %p186
    $region14: #{divergence_loss.1} parent=5 // pred_check_branch
      %189 = sbr.rel (%p187) target = $region16
    $region15: #{divergence_loss.1} parent=5 // pred_region
      // Predicated region
      $region17: #{divergence_loss.1} parent=15 // pred_check
        %p190 = pneg %p49
      $region18: #{divergence_loss.1} parent=15 // pred_check_branch
        %192 = sbr.rel (%p190) target = $region20
      $region19: #{divergence_loss.1} parent=15 // pred_region
        %s193 = sadd.s32 %s18, %s19
        %p194 = scmp.lt.s32.totalorder %s193, 0
        %s195 = scalar_select %p194, %s193, 0
        %s196 = smul.u32 2, %s195
        %p197 = scmp.lt.s32.totalorder %s196, 1
        %s198 = scalar_select %p197, %s196, 1
        %s199 = smul.addr %s198, 8
        %s200 = scalar_lea.vmem %s0, %s199
        %s201 = sadd.s32 %s18, %s19
        %p202 = scmp.lt.s32.totalorder %s201, 0
        %s203 = scalar_select %p202, %s201, 0
        %s204 = smul.u32 2, %s203
      $region20: #{divergence_loss.1} parent=15 // pred_fallthru
        _
      // Predicated region
      $region21: #{divergence_loss.1} parent=15 // pred_check
        %p205 = pneg %p81
      $region22: #{divergence_loss.1} parent=15 // pred_check_branch
        %207 = sbr.rel (%p205) target = $region24
      $region23: #{divergence_loss.1} parent=15 // pred_region
        %s208 = sadd.s32 %s18, %s19
        %p209 = scmp.lt.s32.totalorder %s208, 0
        %s210 = scalar_select %p209, %s208, 0
        %s211 = smul.u32 2, %s210
        %p212 = scmp.lt.s32.totalorder %s211, 1
        %s213 = scalar_select %p212, %s211, 1
        %s214 = smul.addr %s213, 8
        %s215 = scalar_lea.vmem %s1, %s214
        %s216 = sadd.s32 %s18, %s19
        %p217 = scmp.lt.s32.totalorder %s216, 0
        %s218 = scalar_select %p217, %s216, 0
        %s219 = smul.u32 2, %s218
      $region24: #{divergence_loss.1} parent=15 // pred_fallthru
        _
      // Predicated region
      $region25: #{divergence_loss.1} parent=15 // pred_check
        %p220 = pneg %p113
      $region26: #{divergence_loss.1} parent=15 // pred_check_branch
        %222 = sbr.rel (%p220) target = $region28
      $region27: #{divergence_loss.1} parent=15 // pred_region
        %s223 = sadd.s32 %s18, %s19
        %p224 = scmp.lt.s32.totalorder %s223, 0
        %s225 = scalar_select %p224, %s223, 0
        %s226 = smul.u32 2, %s225
        %s227 = ssub.s32 1, %s226
        %s228 = smul.u32 64, %s227
        %p229 = scmp.lt.s32.totalorder %s226, 0
        %s230 = scalar_select %p229, %s226, 0
        %s231 = smul.addr %s230, 4
        %s232 = scalar_lea.vmem %s2, %s231
        %s233 = sadd.s32 %s18, %s19
        %p234 = scmp.lt.s32.totalorder %s233, 0
        %s235 = scalar_select %p234, %s233, 0
        %s236 = smul.u32 2, %s235
        %s237 = ssub.s32 1, %s236
        %s238 = smul.u32 64, %s237
      $region28: #{divergence_loss.1} parent=15 // pred_fallthru
        _
    $region16: #{divergence_loss.1} parent=5 // pred_fallthru
      _
    %p239 = scmp.le.s32.totalorder 1, %s11
    %p240 = scmp.lt.s32.totalorder %s11, 3
    %p241 = pnand %p239, %p240
    %p242 = pneg %p241
    // Predicated region
    $region29: #{divergence_loss.1} parent=5 // pred_check
      _
    $region30: #{divergence_loss.1} parent=5 // pred_check_branch
      %244 = sbr.rel (%p241) target = $region32
    $region31: #{divergence_loss.1} parent=5 // pred_region
      %s245 = ssub.s32 %s11, 1
      %s246 = sadd.s32 %s20, %s21
      %p247 = scmp.lt.s32.totalorder %s246, 0
      %s248 = scalar_select %p247, %s246, 0
      %s249 = smul.u32 2, %s248
      %p250 = scmp.lt.s32.totalorder %s249, 1
      %s251 = scalar_select %p250, %s249, 1
      %s252 = smul.addr %s251, 8
      %s253 = scalar_lea.vmem %s0, %s252
      %p254 = pneg %p55
      %p255 = pneg %p52
      %s256 = sadd.s32 %s20, %s21
      %p257 = scmp.lt.s32.totalorder %s256, 0
      %s258 = scalar_select %p257, %s256, 0
      %s259 = smul.u32 2, %s258
      %p260 = scmp.lt.s32.totalorder %s259, 1
      %s261 = scalar_select %p260, %s259, 1
      %s262 = smul.addr %s261, 8
      %s263 = scalar_lea.vmem %s1, %s262
      %p264 = pneg %p87
      %p265 = pneg %p84
      %s266 = sadd.s32 %s20, %s21
      %p267 = scmp.lt.s32.totalorder %s266, 0
      %s268 = scalar_select %p267, %s266, 0
      %s269 = smul.u32 2, %s268
      %s270 = ssub.s32 1, %s269
      %s271 = smul.u32 64, %s270
      %p272 = scmp.lt.s32.totalorder %s269, 0
      %s273 = scalar_select %p272, %s269, 0
      %s274 = smul.addr %s273, 4
      %s275 = scalar_lea.vmem %s2, %s274
      %p276 = pneg %p119
      %p277 = pneg %p116
      %p278 = pneg %p145
      %p279 = pneg %p142
      %p280 = scmp.lt.s32.totalorder %s20, 1
      %s281 = scalar_select %p280, %s20, 1
      %s282 = smul.addr %s281, 8
      %s283 = scalar_lea.vmem %s3, %s282
      %p284 = pneg %p171
      %p285 = pneg %p168
      %p286 = scmp.lt.s32.totalorder %s20, 1
      %s287 = scalar_select %p286, %s20, 1
      %s288 = smul.addr %s287, 8
      %s289 = scalar_lea.vmem %s4, %s288
      %s290 = sadd.s32 %s20, %s21
      %p291 = scmp.lt.s32.totalorder %s290, 0
      %s292 = scalar_select %p291, %s290, 0
      %s293 = smul.u32 2, %s292
      %p294 = scmp.lt.s32.totalorder %s293, 1
      %s295 = scalar_select %p294, %s293, 1
      %s296 = smul.addr %s295, 8
      %s297 = scalar_lea.vmem %s0, %s296
      %s298 = sadd.s32 %s20, %s21
      %p299 = scmp.lt.s32.totalorder %s298, 0
      %s300 = scalar_select %p299, %s298, 0
      %s301 = smul.u32 2, %s300
      %s302 = sadd.s32 %s20, %s21
      %p303 = scmp.lt.s32.totalorder %s302, 0
      %s304 = scalar_select %p303, %s302, 0
      %s305 = smul.u32 2, %s304
      %p306 = scmp.lt.s32.totalorder %s305, 1
      %s307 = scalar_select %p306, %s305, 1
      %s308 = smul.addr %s307, 8
      %s309 = scalar_lea.vmem %s1, %s308
      %s310 = sadd.s32 %s20, %s21
      %p311 = scmp.lt.s32.totalorder %s310, 0
      %s312 = scalar_select %p311, %s310, 0
      %s313 = smul.u32 2, %s312
      %s314 = sadd.s32 %s20, %s21
      %p315 = scmp.lt.s32.totalorder %s314, 0
      %s316 = scalar_select %p315, %s314, 0
      %s317 = smul.u32 2, %s316
      %s318 = ssub.s32 1, %s317
      %s319 = smul.u32 64, %s318
      %p320 = scmp.lt.s32.totalorder %s317, 0
      %s321 = scalar_select %p320, %s317, 0
      %s322 = smul.addr %s321, 4
      %s323 = scalar_lea.vmem %s2, %s322
      %s324 = sadd.s32 %s20, %s21
      %p325 = scmp.lt.s32.totalorder %s324, 0
      %s326 = scalar_select %p325, %s324, 0
      %s327 = smul.u32 2, %s326
      %s328 = ssub.s32 1, %s327
      %s329 = smul.u32 64, %s328
      %p330 = scmp.lt.s32.totalorder %s20, 1
      %s331 = scalar_select %p330, %s20, 1
      %s332 = smul.addr %s331, 8
      %s333 = scalar_lea.vmem %s3, %s332
      %p334 = scmp.lt.s32.totalorder %s20, 1
      %s335 = scalar_select %p334, %s20, 1
      %s336 = smul.addr %s335, 8
      %s337 = scalar_lea.vmem %s4, %s336
      %s338 = sadd.s32 %s20, %s21
      %p339 = scmp.eq.s32.totalorder %s21, 0
      // Predicated region
      $region33: #{divergence_loss.1} parent=31 // pred_check
        %p340 = pneg %p339
      $region34: #{divergence_loss.1} parent=31 // pred_check_branch
        %342 = sbr.rel (%p340) target = $region36
      $region35: #{divergence_loss.1} parent=31 // pred_region
        %343 = vst [vmem:[%s333] sm:$0xff] 0.0
        %344 = vst [vmem:[%s337] sm:$0xff] 0.0
      $region36: #{divergence_loss.1} parent=31 // pred_fallthru
        _
      %s345 = smul.u32 %s338, 16
      %v346 = vlaneseq
      %v347 = vshrl.u32 %v346, 7
      %v348 = vadd.s32 %v347, 8
      %v349 = vstv %s345
      %v350 = vadd.s32 %v347, %v349
      %v351 = vadd.s32 %v348, %v349
      %v352 = vld [vmem:[%s297] sm:$0xff]
      %v353 = vld [vmem:[%s297 + $0x8] sm:$0xff]
      %v354 = vld [vmem:[%s309] sm:$0xff]
      %v355 = vld [vmem:[%s309 + $0x8] sm:$0xff]
      %v356 = vsub.f32 %v352, %v354
      %v357 = vsub.f32 %v353, %v355
      %v358 = vand.u32 2147483647, %v356
      %v359 = vand.u32 2147483647, %v357
      %vm360 = vcmp.lt.s32.totalorder %v350, 12
      %vm361 = vcmp.lt.s32.totalorder %v351, 12
      %v362 = vsel %vm360, 1, 0
      %v363 = vsel %vm361, 1, 0
      %vm364 = vcmp.eq.s32.totalorder %v362, 1
      %vm365 = vcmp.eq.s32.totalorder %v363, 1
      %v366 = vsel %vm364, %v358, 0.0
      %v367 = vsel %vm365, %v359, 0.0
      %v368 = vld [vmem:[%s333] sm:$0xff]
      %v369 = vadd.f32 %v366, %v367
      %v370 = vadd.f32 %v368, %v369
      %371 = vst [vmem:[%s333] sm:$0xff] %v370
      %s372 = smul.u32 %s338, 8
      %v373 = vstv %s372
      %v374 = vadd.s32 %v347, %v373
      %vm375 = vcmp.lt.s32.totalorder %v374, 4
      %v376 = vld [vmem:[%s323] sm:$0xff]
      %v377 = vand.u32 2147483647, %v376
      %v378 = vsel %vm375, 1, 0
      %vm379 = vcmp.eq.s32.totalorder %v378, 1
      %v380 = vsel %vm379, %v377, 0.0
      %v381 = vld [vmem:[%s337] sm:$0xff]
      %v382 = vadd.f32 %v380, 0.0
      %v383 = vadd.f32 %v381, %v382
      %384 = vst [vmem:[%s337] sm:$0xff] %v383
      %p385 = scmp.lt.s32.totalorder %s20, 1
      %s386 = scalar_select %p385, %s20, 1
      %s387 = smul.addr %s386, 8
      %s388 = scalar_lea.vmem %s3, %s387
      %p389 = scmp.lt.s32.totalorder %s20, 1
      %s390 = scalar_select %p389, %s20, 1
      %s391 = smul.addr %s390, 8
      %s392 = scalar_lea.vmem %s4, %s391
      // Predicated region
      $region37: #{divergence_loss.1} parent=31 // pred_check
        %p393 = pneg %p142
      $region38: #{divergence_loss.1} parent=31 // pred_check_branch
        %395 = sbr.rel (%p393) target = $region40
      $region39: #{divergence_loss.1} parent=31 // pred_region
        _
      $region40: #{divergence_loss.1} parent=31 // pred_fallthru
        _
      // Predicated region
      $region41: #{divergence_loss.1} parent=31 // pred_check
        %p396 = pneg %p168
      $region42: #{divergence_loss.1} parent=31 // pred_check_branch
        %398 = sbr.rel (%p396) target = $region44
      $region43: #{divergence_loss.1} parent=31 // pred_region
        _
      $region44: #{divergence_loss.1} parent=31 // pred_fallthru
        _
    $region32: #{divergence_loss.1} parent=5 // pred_fallthru
      _
    %p399 = scmp.le.s32.totalorder 2, %s11
    // Predicated region
    $region45: #{divergence_loss.1} parent=5 // pred_check
      %p400 = pneg %p399
    $region46: #{divergence_loss.1} parent=5 // pred_check_branch
      %402 = sbr.rel (%p400) target = $region48
    $region47: #{divergence_loss.1} parent=5 // pred_region
      %s403 = ssub.s32 %s11, 2
      // Predicated region
      $region49: #{divergence_loss.1} parent=47 // pred_check
        %p404 = pneg %p148
      $region50: #{divergence_loss.1} parent=47 // pred_check_branch
        %406 = sbr.rel (%p404) target = $region52
      $region51: #{divergence_loss.1} parent=47 // pred_region
        %p407 = scmp.lt.s32.totalorder %s22, 1
        %s408 = scalar_select %p407, %s22, 1
        %s409 = smul.addr %s408, 8
        %s410 = scalar_lea.vmem %s3, %s409
      $region52: #{divergence_loss.1} parent=47 // pred_fallthru
        _
      // Predicated region
      $region53: #{divergence_loss.1} parent=47 // pred_check
        %p411 = pneg %p174
      $region54: #{divergence_loss.1} parent=47 // pred_check_branch
        %413 = sbr.rel (%p411) target = $region56
      $region55: #{divergence_loss.1} parent=47 // pred_region
        %p414 = scmp.lt.s32.totalorder %s22, 1
        %s415 = scalar_select %p414, %s22, 1
        %s416 = smul.addr %s415, 8
        %s417 = scalar_lea.vmem %s4, %s416
      $region56: #{divergence_loss.1} parent=47 // pred_fallthru
        _
    $region48: #{divergence_loss.1} parent=5 // pred_fallthru
      _
  $region6: #{divergence_loss.1} parent=0 // loop_footer
    %s15 = sadd.s32 1, %s11
  $region7: #{divergence_loss.1} parent=0 // loop_footer_branch
    %10 = sbr.rel target = $region3
  $region8: #{divergence_loss.1} parent=0 // loop_exit
    _

</llo_original>
